<compile_context>
chip_gen: v7x
topology: tpu7x:2x2x1
jax: 0.10.0
libtpu: 0.0.40
codegen_flags: <defaults>
</compile_context>

<pallas_src>
import jax
import jax.numpy as jnp
from jax import lax
from jax.experimental import pallas as pl
from jax.experimental.pallas import tpu as pltpu

SCALE = 5.0
DROP_P = 0.5


def _attn_kernel(x1_ref, x2_ref, bits_ref, o_ref):
    # x1_ref: (bm, K), x2_ref: (N, K), bits_ref: (bm, N), o_ref: (bm, K)
    # Fold the qk scale into q: applied over bm*K elements instead of bm*N.
    q = (x1_ref[...].astype(jnp.float32) * SCALE).astype(jnp.bfloat16)
    k = x2_ref[...].astype(jnp.bfloat16)

    # qk = q @ k^T, contracting on the K axis directly (no materialized k.T).
    qk = lax.dot_general(
        q, k, (((1,), (1,)), ((), ())), preferred_element_type=jnp.float32
    )  # (bm, N)

    # Softmax over the last dim with the inverted-dropout 1/(1-p) scale folded
    # into the per-row normalizer (a (bm, 1) vector, cheap).
    m = jnp.max(qk, axis=-1, keepdims=True)
    e = jnp.exp(qk - m)
    inv = (1.0 / (1.0 - DROP_P)) / jnp.sum(e, axis=-1, keepdims=True)  # (bm, 1)

    # Dropout(p=0.5): single compare + select + one multiply over (bm, N).
    keep = bits_ref[...] < jnp.uint32(2 ** 31)  # P(keep) = 0.5
    p_drop = jnp.where(keep, e * inv, 0.0).astype(jnp.bfloat16)  # (bm, N)

    # output = dropout_qk @ x2
    out = jnp.dot(p_drop, k, preferred_element_type=jnp.float32)  # (bm, K)
    o_ref[...] = out.astype(o_ref.dtype)


def model_forward(x1, x2, dropout_key):
    """x1: (1, M, K), x2: (1, N, K) -> (1, M, K), dropout in training mode."""
    assert x1.shape[0] == 1 and x2.shape[0] == 1
    M, K = x1.shape[1], x1.shape[2]
    N = x2.shape[1]
    assert x2.shape[2] == K

    x1_2d = x1.reshape(M, K)
    x2_2d = x2.reshape(N, K)

    # Uniform uint32 random bits for the dropout mask, generated host-side.
    bits = jax.random.bits(dropout_key, (M, N), dtype=jnp.uint32)

    # Tile over M; block equals full array dims when the problem is small.
    block_m = M if M <= 128 else 128
    grid_m = pl.cdiv(M, block_m)

    cost = pl.CostEstimate(
        flops=4 * M * N * K,           # two matmuls, 2*M*N*K flops each
        transcendentals=M * N,         # exp in the softmax
        bytes_accessed=4 * (M * K + N * K + M * N + M * K),
    )

    out = pl.pallas_call(
        _attn_kernel,
        out_shape=jax.ShapeDtypeStruct((M, K), jnp.float32),
        grid=(grid_m,),
        in_specs=[
            pl.BlockSpec((block_m, K), lambda i: (i, 0)),
            pl.BlockSpec((N, K), lambda i: (0, 0)),
            pl.BlockSpec((block_m, N), lambda i: (i, 0)),
        ],
        out_specs=pl.BlockSpec((block_m, K), lambda i: (i, 0)),
        compiler_params=pltpu.CompilerParams(
            dimension_semantics=("parallel",),
            vmem_limit_bytes=64 << 20,
        ),
        cost_estimate=cost,
    )(x1_2d, x2_2d, bits)

    return out.reshape(1, M, K)


if __name__ == "__main__":
    key = jax.random.PRNGKey(0)
    k1, k2, k_drop = jax.random.split(key, 3)
    # Shapes from the PyTorch module: x1 (1, 2, 4), x2 (1, 3, 4)
    x1 = jax.random.normal(k1, (1, 2, 4), dtype=jnp.float32)
    x2 = jax.random.normal(k2, (1, 3, 4), dtype=jnp.float32)

    out = model_forward(x1, x2, k_drop)
    jax.block_until_ready(out)

    assert out.shape == (1, 2, 4)
    assert out.dtype == jnp.float32
    print("KERNEL_OK")
</pallas_src>

<mosaic_0001>
module attributes {stable_mosaic.version = 11 : i64} {
  func.func @_attn_kernel(%arg0: i32, %arg1: memref<2x4xf32, #tpu.memory_space<vmem>>, %arg2: memref<3x4xf32, #tpu.memory_space<vmem>>, %arg3: memref<2x3xi32, #tpu.memory_space<vmem>>, %arg4: memref<2x4xf32, #tpu.memory_space<vmem>>) attributes {dimension_semantics = [#tpu.dimension_semantics<parallel>], iteration_bounds = array<i64: 1>, scalar_prefetch = 0 : i64, scratch_operands = 0 : i64, tpu.core_type = #tpu.core_type<tc>, window_params = [{transform_indices = @transform_0, window_bounds = array<i64: 2, 4>}, {pipeline_mode = #tpu.pipeline_mode<synchronous>, transform_indices = @transform_1, window_bounds = array<i64: 3, 4>}, {transform_indices = @transform_2, window_bounds = array<i64: 2, 3>}, {transform_indices = @transform_3, window_bounds = array<i64: 2, 4>}]} {
    %c0 = arith.constant 0 : index
    %c0_0 = arith.constant 0 : index
    %0 = vector.load %arg1[%c0, %c0_0] : memref<2x4xf32, #tpu.memory_space<vmem>>, vector<2x4xf32>
    %cst = arith.constant 5.000000e+00 : f32
    %1 = vector.broadcast %cst : f32 to vector<2x4xf32>
    %2 = arith.mulf %0, %1 : vector<2x4xf32>
    %3 = arith.truncf %2 : vector<2x4xf32> to vector<2x4xbf16>
    %c0_1 = arith.constant 0 : index
    %c0_2 = arith.constant 0 : index
    %4 = vector.load %arg2[%c0_1, %c0_2] : memref<3x4xf32, #tpu.memory_space<vmem>>, vector<3x4xf32>
    %5 = arith.truncf %4 : vector<3x4xf32> to vector<3x4xbf16>
    %cst_3 = arith.constant dense<0.000000e+00> : vector<2x3xf32>
    %6 = tpu.matmul %3, %5, %cst_3 {dimension_numbers = #tpu.dot_dimension_numbers<[1], [1], [0], [0], [0, 0, 1, 0], [], []>} : vector<2x4xbf16>, vector<3x4xbf16>, vector<2x3xf32> -> vector<2x3xf32>
    %cst_4 = arith.constant dense<0xFF800000> : vector<2xf32>
    %7 = vector.multi_reduction <maximumf>, %6, %cst_4 [1] : vector<2x3xf32> to vector<2xf32>
    %8 = vector.shape_cast %7 : vector<2xf32> to vector<2x1xf32>
    %9 = vector.broadcast %8 : vector<2x1xf32> to vector<2x3xf32>
    %10 = arith.subf %6, %9 : vector<2x3xf32>
    %11 = math.exp %10 : vector<2x3xf32>
    %cst_5 = arith.constant dense<0.000000e+00> : vector<2xf32>
    %12 = vector.multi_reduction <add>, %11, %cst_5 [1] : vector<2x3xf32> to vector<2xf32>
    %13 = vector.shape_cast %12 : vector<2xf32> to vector<2x1xf32>
    %cst_6 = arith.constant 2.000000e+00 : f32
    %14 = vector.broadcast %cst_6 : f32 to vector<2x1xf32>
    %15 = arith.divf %14, %13 : vector<2x1xf32>
    %c0_7 = arith.constant 0 : index
    %c0_8 = arith.constant 0 : index
    %16 = vector.load %arg3[%c0_7, %c0_8] : memref<2x3xi32, #tpu.memory_space<vmem>>, vector<2x3xi32>
    %c-2147483648_i32 = arith.constant -2147483648 : i32
    %17 = vector.broadcast %c-2147483648_i32 : i32 to vector<2x3xi32>
    %18 = arith.cmpi ult, %16, %17 : vector<2x3xi32>
    %19 = vector.broadcast %15 : vector<2x1xf32> to vector<2x3xf32>
    %20 = arith.mulf %11, %19 : vector<2x3xf32>
    %cst_9 = arith.constant 0.000000e+00 : f32
    %21 = vector.broadcast %cst_9 : f32 to vector<2x3xf32>
    %22 = arith.select %18, %20, %21 : vector<2x3xi1>, vector<2x3xf32>
    %23 = arith.truncf %22 : vector<2x3xf32> to vector<2x3xbf16>
    %cst_10 = arith.constant dense<0.000000e+00> : vector<2x4xf32>
    %24 = tpu.matmul %23, %5, %cst_10 {dimension_numbers = #tpu.dot_dimension_numbers<[1], [0], [0], [1], [0, 0, 1, 1], [], []>} : vector<2x3xbf16>, vector<3x4xbf16>, vector<2x4xf32> -> vector<2x4xf32>
    %c0_11 = arith.constant 0 : index
    %c0_12 = arith.constant 0 : index
    %25 = vector.load %arg4[%c0_11, %c0_12] : memref<2x4xf32, #tpu.memory_space<vmem>>, vector<2x4xf32>
    tpu.vector_store %arg4[%c0_11, %c0_12], %24 {strides = array<i32>} : memref<2x4xf32, #tpu.memory_space<vmem>>, vector<2x4xf32>,
    return
  }
  func.func @transform_0(%arg0: i32) -> (i32, i32) {
    %c0_i32 = arith.constant 0 : i32
    %c0_i32_0 = arith.constant 0 : i32
    return %arg0, %c0_i32 : i32, i32
  }
  func.func @transform_1(%arg0: i32) -> (i32, i32) {
    %c0_i32 = arith.constant 0 : i32
    %c0_i32_0 = arith.constant 0 : i32
    %c0_i32_1 = arith.constant 0 : i32
    return %c0_i32, %c0_i32_0 : i32, i32
  }
  func.func @transform_2(%arg0: i32) -> (i32, i32) {
    %c0_i32 = arith.constant 0 : i32
    %c0_i32_0 = arith.constant 0 : i32
    return %arg0, %c0_i32 : i32, i32
  }
  func.func @transform_3(%arg0: i32) -> (i32, i32) {
    %c0_i32 = arith.constant 0 : i32
    %c0_i32_0 = arith.constant 0 : i32
    return %arg0, %c0_i32 : i32, i32
  }
}

</mosaic_0001>

<llo_original>
// kernel: tpu_custom_call.1
$region0: #{tpu_custom_call.1}
  #allocation0 [shape = 'u32[]', space=smem, size = 0x4, offset = 0x4, fixed_abs, tag = 'smem constant byte address 0x4 - core index']
  #allocation1 [shape = 'u32[144,128]{1,0:T(1,128)}', space=vmem, size = 0x12000, scoped, tag = 'internal scratch']
  %s0 = inlined_call_operand.hbm [shape: f32[2,4], index: 0, kind: input, shape index: {}]
  %s1 = inlined_call_operand.hbm [shape: f32[3,4], index: 1, kind: input, shape index: {}]
  %s2 = inlined_call_operand.hbm [shape: u32[2,3], index: 2, kind: input, shape index: {}]
  %s3 = inlined_call_operand.hbm [shape: f32[2,4], index: 3, kind: output, shape index: {}]
  %s4 = sld [smem:[#allocation0]]
  $region34: #{tpu_custom_call.1} parent=0
    _
  %s6 = ssub.s32 1, %s4
  %s7 = scalar_select 0, %s6, %s4
  $region1: #{tpu_custom_call.1} parent=0
    #allocation2 [shape = 'u8[1024]{0}', space=vmem, size = 0x400, scoped, tag = 'input window, operand 0, single buffered']
    #allocation3 [shape = 's32[1]{0}', space=sflag, size = 0x4, scoped, tag = 'scoped memory for tpu_custom_call.1']
    #allocation4 [shape = 's32[1]{0}', space=sflag, size = 0x4, scoped, tag = 'scoped memory for tpu_custom_call.1']
    #allocation5 [shape = 'u8[2048]{0}', space=vmem, size = 0x800, scoped, tag = 'input window, operand 1, single buffered']
    #allocation6 [shape = 's32[1]{0}', space=sflag, size = 0x4, scoped, tag = 'scoped memory for tpu_custom_call.1']
    #allocation7 [shape = 'u8[1024]{0}', space=vmem, size = 0x400, scoped, tag = 'input window, operand 2, single buffered']
    #allocation8 [shape = 'u8[1024]{0}', space=vmem, size = 0x400, scoped, tag = 'output window, operand 0, single buffered']
    %8 = vsyncpa [#allocation3], 0
    %9 = vsyncpa [#allocation6], 0
    %10 = vsyncpa [#allocation4], 0
    // Predicated region
    $region2: #{tpu_custom_call.1} parent=1 // pred_check
      _
    $region3: #{tpu_custom_call.1} parent=1 // pred_check_branch
      %12 = sbr.rel (0) target = $region5
    $region4: #{tpu_custom_call.1} parent=1 // pred_region
      %s14 = ssub.s32 32, 32
      %15 = vsyncadd [#allocation3], %s14
      %s17 = sshll.u32 [#allocation2], 4
      %s18 = int_to_ptr.vmem [resolvable:$true] %s17
      %20 = dma.hbm_to_vmem [thread:$0]  %s0, 32, %s18, [#allocation3]
    $region5: #{tpu_custom_call.1} parent=1 // pred_fallthru
      _
    // Predicated region
    $region6: #{tpu_custom_call.1} parent=1 // pred_check
      _
    $region7: #{tpu_custom_call.1} parent=1 // pred_check_branch
      %22 = sbr.rel (0) target = $region9
    $region8: #{tpu_custom_call.1} parent=1 // pred_region
      %s24 = ssub.s32 64, 64
      %25 = vsyncadd [#allocation6], %s24
      %s27 = sshll.u32 [#allocation5], 4
      %s28 = int_to_ptr.vmem [resolvable:$true] %s27
      %30 = dma.hbm_to_vmem [thread:$0]  %s1, 64, %s28, [#allocation6]
    $region9: #{tpu_custom_call.1} parent=1 // pred_fallthru
      _
    // Predicated region
    $region10: #{tpu_custom_call.1} parent=1 // pred_check
      _
    $region11: #{tpu_custom_call.1} parent=1 // pred_check_branch
      %32 = sbr.rel (0) target = $region13
    $region12: #{tpu_custom_call.1} parent=1 // pred_region
      %s34 = ssub.s32 32, 32
      %35 = vsyncadd [#allocation6], %s34
      %s37 = sshll.u32 [#allocation7], 4
      %s38 = int_to_ptr.vmem [resolvable:$true] %s37
      %40 = dma.hbm_to_vmem [thread:$0]  %s2, 32, %s38, [#allocation6]
    $region13: #{tpu_custom_call.1} parent=1 // pred_fallthru
      _
    // Predicated region
    $region14: #{tpu_custom_call.1} parent=1 // pred_check
      _
    $region15: #{tpu_custom_call.1} parent=1 // pred_check_branch
      %42 = sbr.rel (0) target = $region17
    $region16: #{tpu_custom_call.1} parent=1 // pred_region
      %43 = dma.done [#allocation3], 32
    $region17: #{tpu_custom_call.1} parent=1 // pred_fallthru
      _
    // Predicated region
    $region18: #{tpu_custom_call.1} parent=1 // pred_check
      _
    $region19: #{tpu_custom_call.1} parent=1 // pred_check_branch
      %45 = sbr.rel (0) target = $region21
    $region20: #{tpu_custom_call.1} parent=1 // pred_region
      %46 = dma.done [#allocation6], 64
    $region21: #{tpu_custom_call.1} parent=1 // pred_fallthru
      _
    // Predicated region
    $region22: #{tpu_custom_call.1} parent=1 // pred_check
      _
    $region23: #{tpu_custom_call.1} parent=1 // pred_check_branch
      %48 = sbr.rel (0) target = $region25
    $region24: #{tpu_custom_call.1} parent=1 // pred_region
      %49 = dma.done [#allocation6], 32
    $region25: #{tpu_custom_call.1} parent=1 // pred_fallthru
      _
    %v51 = vld [vmem:[#allocation2] sm:$0x3]
    %v52 = vmul.f32 %v51, 5.0
    %v53 = vpack.c.bf16 %v52, %v52
    %v54 = vld [vmem:[#allocation5] sm:$0x7]
    %v55 = vpack.c.bf16 %v54, %v54
    %vm56 = vcmask 31744
    %v58 = vsel %vm56, %v53, 0
    %v61 = vsel %vm56, %v55, 0
    %63 = vmatprep.subr.bf16.mxu0 0
    %64 = vmatpush1.bf16.xpose.msra.mxu0 %v61
    %65 = vmatprep.subr.bf16.mxu0 0
    %66 = vmatpush1.bf16.xpose.msra.mxu0 0
    %67 = vmatprep.subr.bf16.mxu0 0
    %68 = vmatpush1.bf16.xpose.msra.mxu0 0
    %69 = vmatprep.subr.bf16.mxu0 0
    %70 = vmatpush1.bf16.xpose.msra.mxu0 0
    %71 = vmatprep.subr.bf16.mxu0 0
    %72 = vmatpush1.bf16.xpose.msra.mxu0 0
    %73 = vmatprep.subr.bf16.mxu0 0
    %74 = vmatpush1.bf16.xpose.msra.mxu0 0
    %75 = vmatprep.subr.bf16.mxu0 0
    %76 = vmatpush1.bf16.xpose.msra.mxu0 0
    %77 = vmatprep.subr.bf16.mxu0 0
    %78 = vmatpush1.bf16.xpose.msra.mxu0 0
    %79 = vmatprep.subr.bf16.mxu0 0
    %80 = vmatpush1.bf16.xpose.msra.mxu0 0
    %81 = vmatprep.subr.bf16.mxu0 0
    %82 = vmatpush1.bf16.xpose.msra.mxu0 0
    %83 = vmatprep.subr.bf16.mxu0 0
    %84 = vmatpush1.bf16.xpose.msra.mxu0 0
    %85 = vmatprep.subr.bf16.mxu0 0
    %86 = vmatpush1.bf16.xpose.msra.mxu0 0
    %87 = vmatprep.subr.bf16.mxu0 0
    %88 = vmatpush1.bf16.xpose.msra.mxu0 0
    %89 = vmatprep.subr.bf16.mxu0 0
    %90 = vmatpush1.bf16.xpose.msra.mxu0 0
    %91 = vmatprep.subr.bf16.mxu0 0
    %92 = vmatpush1.bf16.xpose.msra.mxu0 0
    %93 = vmatprep.subr.bf16.mxu0 0
    %94 = vmatpush1.bf16.xpose.msra.mxu0 0
    %95 = vmatprep.mubr.bf16.mxu0 0
    %96 = vmatmul.mubr.bf16.gmra.mrb[0].mxu0 %v58
    %v97 = vpop.f32.mrb[0].mxu0
    %v98 = vadd.f32 0.0, %v97
    %v99 = vpop.f32.mrb[0].mxu0
    %v100 = vpop.f32.mrb[0].mxu0
    %v101 = vpop.f32.mrb[0].mxu0
    %102 = vdwg.mxu0
    %vm103 = vcmask 17408
    %v104 = vsel %vm103, %v98, -inf
    %105 = vmax.xlane.f32.xlu0 %v104
    %v106 = vpop.xlane.xlu0 %105
    %v107 = vsub.f32 %v98, %v106
    %v108 = vmul.f32 %v107, 1.442695
    %v109 = vpow.pop %v108
    %v110 = vsel %vm103, %v109, 0.0
    %111 = vadd.xlane.f32.xlu0 %v110
    %v112 = vpop.xlane.xlu0 %111
    %v113 = vrcp.pop %v112
    %v114 = vmul.f32 2.0, %v113
    %v115 = vld [vmem:[#allocation7] sm:$0x3]
    %vm116 = vcmp.lt.u32.totalorder %v115, 2147483648
    %v117 = vmul.f32 %v109, %v114
    %v118 = vsel %vm116, %v117, 0.0
    %v119 = vpack.c.bf16 %v118, %v118
    %vm120 = vcmask 23552
    %v122 = vsel %vm120, %v119, 0
    %vm124 = vcmask 1040384
    %vm125 = vcmask 1041408
    %v126 = vsel %vm124, 4294967295, 65535
    %v127 = vsel %vm125, %v126, 0
    %v128 = vand.u32 %v55, %v127
    %130 = vmatprep.subr.bf16.mxu0 0
    %131 = vmatpush1.bf16.msra.mxu0 %v128
    %132 = vmatprep.subr.bf16.mxu0 0
    %133 = vmatpush1.bf16.msra.mxu0 0
    %134 = vmatprep.subr.bf16.mxu0 0
    %135 = vmatpush1.bf16.msra.mxu0 0
    %136 = vmatprep.subr.bf16.mxu0 0
    %137 = vmatpush1.bf16.msra.mxu0 0
    %138 = vmatprep.subr.bf16.mxu0 0
    %139 = vmatpush1.bf16.msra.mxu0 0
    %140 = vmatprep.subr.bf16.mxu0 0
    %141 = vmatpush1.bf16.msra.mxu0 0
    %142 = vmatprep.subr.bf16.mxu0 0
    %143 = vmatpush1.bf16.msra.mxu0 0
    %144 = vmatprep.subr.bf16.mxu0 0
    %145 = vmatpush1.bf16.msra.mxu0 0
    %146 = vmatprep.subr.bf16.mxu0 0
    %147 = vmatpush1.bf16.msra.mxu0 0
    %148 = vmatprep.subr.bf16.mxu0 0
    %149 = vmatpush1.bf16.msra.mxu0 0
    %150 = vmatprep.subr.bf16.mxu0 0
    %151 = vmatpush1.bf16.msra.mxu0 0
    %152 = vmatprep.subr.bf16.mxu0 0
    %153 = vmatpush1.bf16.msra.mxu0 0
    %154 = vmatprep.subr.bf16.mxu0 0
    %155 = vmatpush1.bf16.msra.mxu0 0
    %156 = vmatprep.subr.bf16.mxu0 0
    %157 = vmatpush1.bf16.msra.mxu0 0
    %158 = vmatprep.subr.bf16.mxu0 0
    %159 = vmatpush1.bf16.msra.mxu0 0
    %160 = vmatprep.subr.bf16.mxu0 0
    %161 = vmatpush1.bf16.msra.mxu0 0
    %162 = vmatprep.mubr.bf16.mxu0 0
    %163 = vmatmul.mubr.bf16.gmra.mrb[0].mxu0 %v122
    %v164 = vpop.f32.mrb[0].mxu0
    %v165 = vadd.f32 0.0, %v164
    %v166 = vpop.f32.mrb[0].mxu0
    %v167 = vpop.f32.mrb[0].mxu0
    %v168 = vpop.f32.mrb[0].mxu0
    %169 = vdwg.mxu0
    %vm170 = vcmask 25600
    %171 = vst.msk [vmem:[#allocation8] sm:$0x3] %vm170, %v165
    // Predicated region
    $region26: #{tpu_custom_call.1} parent=1 // pred_check
      _
    $region27: #{tpu_custom_call.1} parent=1 // pred_check_branch
      %173 = sbr.rel (0) target = $region29
    $region28: #{tpu_custom_call.1} parent=1 // pred_region
      %s175 = ssub.s32 32, 32
      %176 = vsyncadd [#allocation4], %s175
      %s178 = sshll.u32 [#allocation8], 4
      %s179 = int_to_ptr.vmem [resolvable:$true] %s178
      %181 = dma.vmem_to_hbm [thread:$0]  %s179, 32, %s3, [#allocation4]
    $region29: #{tpu_custom_call.1} parent=1 // pred_fallthru
      _
    // Predicated region
    $region30: #{tpu_custom_call.1} parent=1 // pred_check
      _
    $region31: #{tpu_custom_call.1} parent=1 // pred_check_branch
      %183 = sbr.rel (0) target = $region33
    $region32: #{tpu_custom_call.1} parent=1 // pred_region
      %184 = dma.done [#allocation4], 32
    $region33: #{tpu_custom_call.1} parent=1 // pred_fallthru
      _
    %185 = vsyncpa [#allocation3], 1
    %186 = vsyncpa [#allocation6], 1
    %187 = vsyncpa [#allocation4], 1

</llo_original>
